<compile_context>
chip_gen: v6e
topology: v6e:2x2x1
jax: 0.10.0
libtpu: 0.0.40
codegen_flags: <defaults>
</compile_context>

<pallas_src>
import functools

import jax
import jax.numpy as jnp
from jax.experimental import pallas as pl
from jax.experimental.pallas import tpu as pltpu


def _round_up(x: int, m: int) -> int:
    return (x + m - 1) // m * m


# ------------------------------- kernel -------------------------------
def _lmc_kernel(x_ref, tgt_ref, msk_ref, loss_ref, num_acc, den_acc, *, block_v):
    i = pl.program_id(0)          # row-tile index (over N = B*T)
    j = pl.program_id(1)          # vocab-tile index (over V)
    ni = pl.num_programs(0)
    nj = pl.num_programs(1)

    @pl.when(jnp.logical_and(i == 0, j == 0))
    def _init():
        num_acc[...] = jnp.zeros_like(num_acc)
        den_acc[...] = jnp.zeros_like(den_acc)
        loss_ref[...] = jnp.zeros_like(loss_ref)

    x = x_ref[...]                # (bn, bv) f32 log-probs tile
    tgt = tgt_ref[...]            # (bn, 1)  int32 target indices
    msk = msk_ref[...]            # (bn, 1)  f32 mask

    # gather input[n, target[n]] restricted to this vocab tile:
    # column id == target  ->  select, then lane-reduce.
    col = jax.lax.broadcasted_iota(jnp.int32, x.shape, 1) + j * block_v
    picked = jnp.sum(jnp.where(col == tgt, x, 0.0), axis=1, keepdims=True)   # (bn, 1)

    # masked negative log-likelihood contribution of this tile (scalar, kept (1,1)).
    num_acc[...] += jnp.sum(-picked * msk, axis=0, keepdims=True)            # (1, 1)

    # mask sum: count each row tile exactly once (first vocab tile).
    @pl.when(j == 0)
    def _den():
        den_acc[...] += jnp.sum(msk, axis=0, keepdims=True)                  # (1, 1)

    # finalize: single divide, single output write.
    @pl.when(jnp.logical_and(i == ni - 1, j == nj - 1))
    def _fin():
        loss_ref[...] = num_acc[...] / den_acc[...]


# ------------------------------- wrapper -------------------------------
def language_model_criterion(inp, target, mask, *, block_n=256, block_v=1024):
    """loss = sum(-logp[n, target[n]] * mask[n]) / sum(mask), computed by one Pallas kernel."""
    V = inp.shape[-1]
    x = inp.reshape(-1, V).astype(jnp.float32)
    N = x.shape[0]
    tgt = target.reshape(-1, 1).astype(jnp.int32)
    msk = mask.reshape(-1, 1).astype(jnp.float32)

    # Tile sizes: sublane-aligned rows, lane-aligned (>=128) vocab chunks.
    bn = _round_up(min(block_n, _round_up(N, 8)), 8)
    bv = _round_up(min(block_v, _round_up(V, 128)), 128)
    n_pad = _round_up(N, bn)
    v_pad = _round_up(V, bv)

    if n_pad != N or v_pad != V:
        x = jnp.pad(x, ((0, n_pad - N), (0, v_pad - V)))
    if n_pad != N:
        # padded rows get mask = 0 -> contribute nothing to numerator or denominator;
        # padded vocab columns are never selected since target < V.
        tgt = jnp.pad(tgt, ((0, n_pad - N), (0, 0)))
        msk = jnp.pad(msk, ((0, n_pad - N), (0, 0)))

    grid = (n_pad // bn, v_pad // bv)
    loss = pl.pallas_call(
        functools.partial(_lmc_kernel, block_v=bv),
        out_shape=jax.ShapeDtypeStruct((1, 1), jnp.float32),
        grid_spec=pltpu.PrefetchScalarGridSpec(
            num_scalar_prefetch=0,
            grid=grid,
            in_specs=[
                pl.BlockSpec((bn, bv), lambda i, j: (i, j)),   # log-probs tile
                pl.BlockSpec((bn, 1), lambda i, j: (i, 0)),    # targets (re-copy only when i changes)
                pl.BlockSpec((bn, 1), lambda i, j: (i, 0)),    # mask    (re-copy only when i changes)
            ],
            out_specs=pl.BlockSpec((1, 1), lambda i, j: (0, 0)),
            scratch_shapes=[
                pltpu.VMEM((1, 1), jnp.float32),   # numerator accumulator
                pltpu.VMEM((1, 1), jnp.float32),   # denominator accumulator
            ],
        ),
        compiler_params=pltpu.CompilerParams(
            dimension_semantics=("arbitrary", "arbitrary")),
    )(x, tgt, msk)
    return loss[0, 0]


# ------------------------------- demo -------------------------------
if __name__ == "__main__":
    B, T, V = 4, 16, 300          # N = 64 rows, V padded to 384 -> grid (2, 3) with the tiles below
    key = jax.random.PRNGKey(0)
    k1, k2 = jax.random.split(key, 2)

    logits = jax.random.normal(k1, (B, T, V), jnp.float32)
    logp = jax.nn.log_softmax(logits, axis=-1)                     # "input": log-probabilities
    target = jax.random.randint(k2, (B, T), 0, V, dtype=jnp.int32)
    lengths = jnp.array([16, 11, 7, 3], dtype=jnp.int32)
    mask = (jnp.arange(T, dtype=jnp.int32)[None, :] < lengths[:, None]).astype(jnp.float32)

    # small explicit tiles so the grid has multiple row tiles and vocab tiles
    loss = language_model_criterion(logp, target, mask, block_n=32, block_v=128)
    loss = jax.block_until_ready(loss)

    # pure-JAX reference
    x2 = logp.reshape(-1, V)
    t2 = target.reshape(-1)
    m2 = mask.reshape(-1)
    ref = jnp.sum(-jnp.take_along_axis(x2, t2[:, None], axis=1)[:, 0] * m2) / jnp.sum(m2)

    assert loss.shape == ()
    assert jnp.allclose(loss, ref, rtol=1e-5, atol=1e-5), (float(loss), float(ref))
    print("KERNEL_OK")
</pallas_src>

<mosaic_0001>
module attributes {stable_mosaic.version = 11 : i64} {
  func.func @_lmc_kernel(%arg0: i32, %arg1: i32, %arg2: memref<32x128xf32, #tpu.memory_space<vmem>>, %arg3: memref<32x1xi32, #tpu.memory_space<vmem>>, %arg4: memref<32x1xf32, #tpu.memory_space<vmem>>, %arg5: memref<1x1xf32, #tpu.memory_space<vmem>>, %arg6: memref<1x1xf32, #tpu.memory_space<vmem>>, %arg7: memref<1x1xf32, #tpu.memory_space<vmem>>) attributes {dimension_semantics = [#tpu.dimension_semantics<arbitrary>, #tpu.dimension_semantics<arbitrary>], iteration_bounds = array<i64: 2, 3>, scalar_prefetch = 0 : i64, scratch_operands = 2 : i64, tpu.core_type = #tpu.core_type<tc>, window_params = [{transform_indices = @transform_0, window_bounds = array<i64: 32, 128>}, {transform_indices = @transform_1, window_bounds = array<i64: 32, 1>}, {transform_indices = @transform_2, window_bounds = array<i64: 32, 1>}, {pipeline_mode = #tpu.pipeline_mode<synchronous>, transform_indices = @transform_3, window_bounds = array<i64: 1, 1>}]} {
    %c0_i32 = arith.constant 0 : i32
    %0 = arith.cmpi eq, %arg0, %c0_i32 : i32
    %c0_i32_0 = arith.constant 0 : i32
    %1 = arith.cmpi eq, %arg1, %c0_i32_0 : i32
    %2 = arith.andi %0, %1 : i1
    %3 = arith.extui %2 : i1 to i32
    %c0_i32_1 = arith.constant 0 : i32
    %4 = arith.cmpi ne, %3, %c0_i32_1 : i32
    scf.if %4 {
      %cst_17 = arith.constant 0.000000e+00 : f32
      %34 = vector.broadcast %cst_17 : f32 to vector<1x1xf32>
      %c0_18 = arith.constant 0 : index
      %c0_19 = arith.constant 0 : index
      %35 = vector.load %arg6[%c0_18, %c0_19] : memref<1x1xf32, #tpu.memory_space<vmem>>, vector<1x1xf32>
      tpu.vector_store %arg6[%c0_18, %c0_19], %34 {strides = array<i32>} : memref<1x1xf32, #tpu.memory_space<vmem>>, vector<1x1xf32>,
      %cst_20 = arith.constant 0.000000e+00 : f32
      %36 = vector.broadcast %cst_20 : f32 to vector<1x1xf32>
      %c0_21 = arith.constant 0 : index
      %c0_22 = arith.constant 0 : index
      %37 = vector.load %arg7[%c0_21, %c0_22] : memref<1x1xf32, #tpu.memory_space<vmem>>, vector<1x1xf32>
      tpu.vector_store %arg7[%c0_21, %c0_22], %36 {strides = array<i32>} : memref<1x1xf32, #tpu.memory_space<vmem>>, vector<1x1xf32>,
      %cst_23 = arith.constant 0.000000e+00 : f32
      %38 = vector.broadcast %cst_23 : f32 to vector<1x1xf32>
      %c0_24 = arith.constant 0 : index
      %c0_25 = arith.constant 0 : index
      %39 = vector.load %arg5[%c0_24, %c0_25] : memref<1x1xf32, #tpu.memory_space<vmem>>, vector<1x1xf32>
      tpu.vector_store %arg5[%c0_24, %c0_25], %38 {strides = array<i32>} : memref<1x1xf32, #tpu.memory_space<vmem>>, vector<1x1xf32>,
    } else {
    }
    %c0 = arith.constant 0 : index
    %c0_2 = arith.constant 0 : index
    %5 = vector.load %arg2[%c0, %c0_2] : memref<32x128xf32, #tpu.memory_space<vmem>>, vector<32x128xf32>
    %c0_3 = arith.constant 0 : index
    %c0_4 = arith.constant 0 : index
    %6 = vector.load %arg3[%c0_3, %c0_4] : memref<32x1xi32, #tpu.memory_space<vmem>>, vector<32x1xi32>
    %c0_5 = arith.constant 0 : index
    %c0_6 = arith.constant 0 : index
    %7 = vector.load %arg4[%c0_5, %c0_6] : memref<32x1xf32, #tpu.memory_space<vmem>>, vector<32x1xf32>
    %8 = tpu.iota {dimensions = array<i32: 1>} : vector<32x128xi32>
    %c128_i32 = arith.constant 128 : i32
    %9 = arith.muli %arg1, %c128_i32 : i32
    %10 = vector.broadcast %9 : i32 to vector<32x128xi32>
    %11 = arith.addi %8, %10 : vector<32x128xi32>
    %12 = vector.broadcast %6 : vector<32x1xi32> to vector<32x128xi32>
    %13 = arith.cmpi eq, %11, %12 : vector<32x128xi32>
    %cst = arith.constant 0.000000e+00 : f32
    %14 = vector.broadcast %cst : f32 to vector<32x128xf32>
    %15 = arith.select %13, %5, %14 : vector<32x128xi1>, vector<32x128xf32>
    %cst_7 = arith.constant dense<0.000000e+00> : vector<32xf32>
    %16 = vector.multi_reduction <add>, %15, %cst_7 [1] : vector<32x128xf32> to vector<32xf32>
    %17 = vector.shape_cast %16 : vector<32xf32> to vector<32x1xf32>
    %c0_8 = arith.constant 0 : index
    %c0_9 = arith.constant 0 : index
    %18 = vector.load %arg6[%c0_8, %c0_9] : memref<1x1xf32, #tpu.memory_space<vmem>>, vector<1x1xf32>
    %cst_10 = arith.constant 0.000000e+00 : f32
    %19 = vector.broadcast %cst_10 : f32 to vector<32x1xf32>
    %20 = arith.subf %19, %17 : vector<32x1xf32>
    %21 = arith.mulf %20, %7 : vector<32x1xf32>
    %cst_11 = arith.constant dense<0.000000e+00> : vector<1xf32>
    %22 = vector.multi_reduction <add>, %21, %cst_11 [0] : vector<32x1xf32> to vector<1xf32>
    %23 = vector.shape_cast %22 : vector<1xf32> to vector<1x1xf32>
    %24 = arith.addf %18, %23 : vector<1x1xf32>
    %c0_12 = arith.constant 0 : index
    %c0_13 = arith.constant 0 : index
    %25 = vector.load %arg6[%c0_12, %c0_13] : memref<1x1xf32, #tpu.memory_space<vmem>>, vector<1x1xf32>
    tpu.vector_store %arg6[%c0_12, %c0_13], %24 {strides = array<i32>} : memref<1x1xf32, #tpu.memory_space<vmem>>, vector<1x1xf32>,
    %c0_i32_14 = arith.constant 0 : i32
    %26 = arith.cmpi eq, %arg1, %c0_i32_14 : i32
    %27 = arith.extui %26 : i1 to i32
    %c0_i32_15 = arith.constant 0 : i32
    %28 = arith.cmpi ne, %27, %c0_i32_15 : i32
    scf.if %28 {
      %c0_17 = arith.constant 0 : index
      %c0_18 = arith.constant 0 : index
      %34 = vector.load %arg7[%c0_17, %c0_18] : memref<1x1xf32, #tpu.memory_space<vmem>>, vector<1x1xf32>
      %cst_19 = arith.constant dense<0.000000e+00> : vector<1xf32>
      %35 = vector.multi_reduction <add>, %7, %cst_19 [0] : vector<32x1xf32> to vector<1xf32>
      %36 = vector.shape_cast %35 : vector<1xf32> to vector<1x1xf32>
      %37 = arith.addf %34, %36 : vector<1x1xf32>
      %c0_20 = arith.constant 0 : index
      %c0_21 = arith.constant 0 : index
      %38 = vector.load %arg7[%c0_20, %c0_21] : memref<1x1xf32, #tpu.memory_space<vmem>>, vector<1x1xf32>
      tpu.vector_store %arg7[%c0_20, %c0_21], %37 {strides = array<i32>} : memref<1x1xf32, #tpu.memory_space<vmem>>, vector<1x1xf32>,
    } else {
    }
    %c1_i32 = arith.constant 1 : i32
    %29 = arith.cmpi eq, %arg0, %c1_i32 : i32
    %c2_i32 = arith.constant 2 : i32
    %30 = arith.cmpi eq, %arg1, %c2_i32 : i32
    %31 = arith.andi %29, %30 : i1
    %32 = arith.extui %31 : i1 to i32
    %c0_i32_16 = arith.constant 0 : i32
    %33 = arith.cmpi ne, %32, %c0_i32_16 : i32
    scf.if %33 {
      %c0_17 = arith.constant 0 : index
      %c0_18 = arith.constant 0 : index
      %34 = vector.load %arg6[%c0_17, %c0_18] : memref<1x1xf32, #tpu.memory_space<vmem>>, vector<1x1xf32>
      %c0_19 = arith.constant 0 : index
      %c0_20 = arith.constant 0 : index
      %35 = vector.load %arg7[%c0_19, %c0_20] : memref<1x1xf32, #tpu.memory_space<vmem>>, vector<1x1xf32>
      %36 = arith.divf %34, %35 : vector<1x1xf32>
      %c0_21 = arith.constant 0 : index
      %c0_22 = arith.constant 0 : index
      %37 = vector.load %arg5[%c0_21, %c0_22] : memref<1x1xf32, #tpu.memory_space<vmem>>, vector<1x1xf32>
      tpu.vector_store %arg5[%c0_21, %c0_22], %36 {strides = array<i32>} : memref<1x1xf32, #tpu.memory_space<vmem>>, vector<1x1xf32>,
    } else {
    }
    return
  }
  func.func @transform_0(%arg0: i32, %arg1: i32) -> (i32, i32) {
    %c0_i32 = arith.constant 0 : i32
    return %arg0, %arg1 : i32, i32
  }
  func.func @transform_1(%arg0: i32, %arg1: i32) -> (i32, i32) {
    %c0_i32 = arith.constant 0 : i32
    %c0_i32_0 = arith.constant 0 : i32
    return %arg0, %c0_i32 : i32, i32
  }
  func.func @transform_2(%arg0: i32, %arg1: i32) -> (i32, i32) {
    %c0_i32 = arith.constant 0 : i32
    %c0_i32_0 = arith.constant 0 : i32
    return %arg0, %c0_i32 : i32, i32
  }
  func.func @transform_3(%arg0: i32, %arg1: i32) -> (i32, i32) {
    %c0_i32 = arith.constant 0 : i32
    %c0_i32_0 = arith.constant 0 : i32
    %c0_i32_1 = arith.constant 0 : i32
    return %c0_i32, %c0_i32_0 : i32, i32
  }
}

</mosaic_0001>

<llo_original>
// kernel: tpu_custom_call.1
$region0: #{tpu_custom_call.1}
  #allocation0 [shape = 'u32[]', space=smem, size = 0x4, offset = 0x4, fixed_abs, tag = 'smem constant byte address 0x4 - core index']
  #allocation1 [shape = 'u32[144,128]{1,0:T(1,128)}', space=vmem, size = 0x12000, scoped, tag = 'internal scratch']
  #allocation2 [shape = 'f32[1,1]{1,0:T(1,128)}', space=vmem, size = 0x200, scoped, tag = 'scratch operand']
  #allocation3 [shape = 'f32[1,1]{1,0:T(1,128)}', space=vmem, size = 0x200, scoped, tag = 'scratch operand']
  %s0 = inlined_call_operand.hbm [shape: f32[64,384], index: 0, kind: input, shape index: {}]
  %s1 = inlined_call_operand.vmem [shape: s32[64,1], index: 1, kind: input, shape index: {}]
  %s2 = inlined_call_operand.vmem [shape: f32[64,1], index: 2, kind: input, shape index: {}]
  %s3 = inlined_call_operand.hbm [shape: f32[1,1], index: 3, kind: output, shape index: {}]
  %s4 = sld [smem:[#allocation0]]
  $region61: #{tpu_custom_call.1} parent=0
    _
  %s6 = ssub.s32 1, %s4
  %s7 = scalar_select 0, %s6, %s4
  $region1: #{tpu_custom_call.1} parent=0
    #allocation4 [shape = 'u8[32768]{0}', space=vmem, size = 0x8000, scoped, tag = 'input window, operand 0']
    #allocation5 [shape = 's32[2]{0}', space=sflag, size = 0x8, scoped, tag = 'scoped memory for tpu_custom_call.1']
    #allocation6 [shape = 's32[2]{0}', space=sflag, size = 0x8, scoped, tag = 'scoped memory for tpu_custom_call.1']
    #allocation7 [shape = 'u8[512]{0}', space=vmem, size = 0x400, scoped, tag = 'output window, operand 0, single buffered']
    %8 = vsyncpa [#allocation5], 0
    %s9 = scalar_lea.sflag [#allocation5], 1
    %10 = vsyncpa %s9, 0
    %11 = vsyncpa [#allocation6], 0
    loop: start=0, step=1, limit=8
    $region2: #{tpu_custom_call.1} parent=1 // loop_pre_header
      _
    $region3: #{tpu_custom_call.1} parent=1 // loop_header
      %s13 = sphi 0, %s17
      %p14 = scmp.ge.s32.totalorder %s13, 8
      %s20 = sphi 0, %s32
      %s21 = sphi 0, %s28
      %s22 = sphi 0, %s20
      %s23 = sphi 0, %s21
      %s24 = sphi 0, %s22
      %s25 = sphi 0, %s23
      %s37 = sphi 0, %s39
      %s40 = sphi 0, %s37
      %s41 = sphi 0, %s40
      %s57 = sphi 0, %s41
      %s63 = sphi 0, %s65
      %s66 = sphi 0, %s63
      %s67 = sphi 0, %s66
      %s83 = sphi 0, %s67
      %s89 = sphi 0, %s91
      %s92 = sphi 0, %s89
      %s93 = sphi 0, %s92
      %s109 = sphi 0, %s93
      %s113 = sphi 0, %s113
      %s115 = sphi 0, %s113
      %s116 = sphi 0, %s115
      %s130 = sphi 0, %s116
    $region4: #{tpu_custom_call.1} parent=1 // loop_header_branch
      %16 = sbr.rel (%p14) target = $region8
    $region5: #{tpu_custom_call.1} parent=1 // loop_body
      %s18 = ssub.s32 %s13, 1
      %s19 = ssub.s32 %s13, 2
      %s26 = sadd.s32 1, %s21
      %p27 = scmp.ge.s32.totalorder %s26, 3
      %s28 = scalar_select %p27, 0, %s26
      %s29 = sadd.s32 1, %s20
      %s30 = scalar_select %p27, %s29, %s20
      %p31 = scmp.ge.s32.totalorder %s30, 2
      %s32 = scalar_select %p31, 0, %s30
      %s33 = ssub.s32 %s20, %s32
      %s34 = ssub.s32 %s21, %s28
      %s35 = sor.u32 %s33, %s34
      %p36 = scmp.eq.s32.totalorder %s35, 0
      %s38 = sadd.s32 %s37, 1
      %s39 = scalar_select %p36, %s37, %s38
      %p42 = pneg %p36
      %p43 = scmp.eq.s32.totalorder %s13, 5
      %p44 = por %p42, %p43
      %p45 = scmp.ne.s32.totalorder %s37, %s40
      %p46 = scmp.eq.s32.totalorder %s13, 0
      %p47 = por %p45, %p46
      %p48 = scmp.ne.s32.totalorder %s37, %s40
      %p49 = scmp.eq.s32.totalorder %s18, 5
      %p50 = por %p48, %p49
      %p51 = scmp.ne.s32.totalorder %s40, %s41
      %p52 = scmp.eq.s32.totalorder %s18, 0
      %p53 = por %p51, %p52
      %p54 = scmp.ne.s32.totalorder %s40, %s41
      %p55 = scmp.eq.s32.totalorder %s19, 5
      %p56 = por %p54, %p55
      %p58 = scmp.ne.s32.totalorder %s41, %s57
      %p59 = scmp.eq.s32.totalorder %s19, 0
      %p60 = por %p58, %p59
      %s61 = ssub.s32 %s20, %s32
      %p62 = scmp.eq.s32.totalorder %s61, 0
      %s64 = sadd.s32 %s63, 1
      %s65 = scalar_select %p62, %s63, %s64
      %p68 = pneg %p62
      %p69 = scmp.eq.s32.totalorder %s13, 5
      %p70 = por %p68, %p69
      %p71 = scmp.ne.s32.totalorder %s63, %s66
      %p72 = scmp.eq.s32.totalorder %s13, 0
      %p73 = por %p71, %p72
      %p74 = scmp.ne.s32.totalorder %s63, %s66
      %p75 = scmp.eq.s32.totalorder %s18, 5
      %p76 = por %p74, %p75
      %p77 = scmp.ne.s32.totalorder %s66, %s67
      %p78 = scmp.eq.s32.totalorder %s18, 0
      %p79 = por %p77, %p78
      %p80 = scmp.ne.s32.totalorder %s66, %s67
      %p81 = scmp.eq.s32.totalorder %s19, 5
      %p82 = por %p80, %p81
      %p84 = scmp.ne.s32.totalorder %s67, %s83
      %p85 = scmp.eq.s32.totalorder %s19, 0
      %p86 = por %p84, %p85
      %s87 = ssub.s32 %s20, %s32
      %p88 = scmp.eq.s32.totalorder %s87, 0
      %s90 = sadd.s32 %s89, 1
      %s91 = scalar_select %p88, %s89, %s90
      %p94 = pneg %p88
      %p95 = scmp.eq.s32.totalorder %s13, 5
      %p96 = por %p94, %p95
      %p97 = scmp.ne.s32.totalorder %s89, %s92
      %p98 = scmp.eq.s32.totalorder %s13, 0
      %p99 = por %p97, %p98
      %p100 = scmp.ne.s32.totalorder %s89, %s92
      %p101 = scmp.eq.s32.totalorder %s18, 5
      %p102 = por %p100, %p101
      %p103 = scmp.ne.s32.totalorder %s92, %s93
      %p104 = scmp.eq.s32.totalorder %s18, 0
      %p105 = por %p103, %p104
      %p106 = scmp.ne.s32.totalorder %s92, %s93
      %p107 = scmp.eq.s32.totalorder %s19, 5
      %p108 = por %p106, %p107
      %p110 = scmp.ne.s32.totalorder %s93, %s109
      %p111 = scmp.eq.s32.totalorder %s19, 0
      %p112 = por %p110, %p111
      %s114 = sadd.s32 %s113, 1
      %p117 = scmp.eq.s32.totalorder %s13, 5
      %p118 = scmp.ne.s32.totalorder %s113, %s115
      %p119 = scmp.eq.s32.totalorder %s13, 0
      %p120 = por %p118, %p119
      %p121 = scmp.ne.s32.totalorder %s113, %s115
      %p122 = scmp.eq.s32.totalorder %s18, 5
      %p123 = por %p121, %p122
      %p124 = scmp.ne.s32.totalorder %s115, %s116
      %p125 = scmp.eq.s32.totalorder %s18, 0
      %p126 = por %p124, %p125
      %p127 = scmp.ne.s32.totalorder %s115, %s116
      %p128 = scmp.eq.s32.totalorder %s19, 5
      %p129 = por %p127, %p128
      %p131 = scmp.ne.s32.totalorder %s116, %s130
      %p132 = scmp.eq.s32.totalorder %s19, 0
      %p133 = por %p131, %p132
      %p134 = scmp.le.s32.totalorder 1, %s13
      %p135 = scmp.lt.s32.totalorder %s13, 7
      %p136 = pnand %p134, %p135
      %p137 = pneg %p136
      // Predicated region
      $region9: #{tpu_custom_call.1} parent=5 // pred_check
        _
      $region10: #{tpu_custom_call.1} parent=5 // pred_check_branch
        %139 = sbr.rel (%p136) target = $region12
      $region11: #{tpu_custom_call.1} parent=5 // pred_region
        %s140 = ssub.s32 %s13, 1
      $region12: #{tpu_custom_call.1} parent=5 // pred_fallthru
        _
      %p141 = scmp.lt.s32.totalorder %s13, 6
      // Predicated region
      $region13: #{tpu_custom_call.1} parent=5 // pred_check
        %p142 = pneg %p141
      $region14: #{tpu_custom_call.1} parent=5 // pred_check_branch
        %144 = sbr.rel (%p142) target = $region16
      $region15: #{tpu_custom_call.1} parent=5 // pred_region
        // Predicated region
        $region17: #{tpu_custom_call.1} parent=15 // pred_check
          %p145 = pneg %p47
        $region18: #{tpu_custom_call.1} parent=15 // pred_check_branch
          %147 = sbr.rel (%p145) target = $region20
        $region19: #{tpu_custom_call.1} parent=15 // pred_region
          %s148 = sand.u32 %s37, 1
          %s149 = scalar_lea.sflag [#allocation5], %s148
          %s150 = sand.u32 %s37, 1
          %s151 = smul.addr %s150, 32
          %s152 = scalar_lea.vmem [#allocation4], %s151
          %s153 = smul.u32 4, %s20
          %s155 = ssub.s32 512, 512
          %156 = vsyncadd %s149, %s155
          %s157 = smul.addr %s153, 3
          %s158 = sadd.s32 %s21, %s157
          %s159 = smul.addr %s158, 128
          %s160 = scalar_lea.hbm %s0, %s159
          %s161 = sshll.u32 %s152, 4
          %s162 = int_to_ptr.vmem [resolvable:$true] %s161
          %167 = dma.hbm_to_vmem [thread:$0]  %s160, 512, %s162, %s149, 384, 128, 8
        $region20: #{tpu_custom_call.1} parent=15 // pred_fallthru
          _
        // Predicated region
        $region21: #{tpu_custom_call.1} parent=15 // pred_check
          %p168 = pneg %p73
        $region22: #{tpu_custom_call.1} parent=15 // pred_check_branch
          %170 = sbr.rel (%p168) target = $region24
        $region23: #{tpu_custom_call.1} parent=15 // pred_region
          %s171 = smul.u32 4, %s20
          %p172 = scmp.lt.s32.totalorder %s171, 7
          %s173 = scalar_select %p172, %s171, 7
          %s174 = smul.addr %s173, 8
          %s175 = scalar_lea.vmem %s1, %s174
          %s176 = smul.u32 4, %s20
        $region24: #{tpu_custom_call.1} parent=15 // pred_fallthru
          _
        // Predicated region
        $region25: #{tpu_custom_call.1} parent=15 // pred_check
          %p177 = pneg %p99
        $region26: #{tpu_custom_call.1} parent=15 // pred_check_branch
          %179 = sbr.rel (%p177) target = $region28
        $region27: #{tpu_custom_call.1} parent=15 // pred_region
          %s180 = smul.u32 4, %s20
          %p181 = scmp.lt.s32.totalorder %s180, 7
          %s182 = scalar_select %p181, %s180, 7
          %s183 = smul.addr %s182, 8
          %s184 = scalar_lea.vmem %s2, %s183
          %s185 = smul.u32 4, %s20
        $region28: #{tpu_custom_call.1} parent=15 // pred_fallthru
          _
      $region16: #{tpu_custom_call.1} parent=5 // pred_fallthru
        _
      %p186 = scmp.le.s32.totalorder 1, %s13
      %p187 = scmp.lt.s32.totalorder %s13, 7
      %p188 = pnand %p186, %p187
      %p189 = pneg %p188
      // Predicated region
      $region29: #{tpu_custom_call.1} parent=5 // pred_check
        _
      $region30: #{tpu_custom_call.1} parent=5 // pred_check_branch
        %191 = sbr.rel (%p188) target = $region32
      $region31: #{tpu_custom_call.1} parent=5 // pred_region
        %s192 = ssub.s32 %s13, 1
        %s193 = sand.u32 %s40, 1
        %s194 = scalar_lea.sflag [#allocation5], %s193
        %s195 = sand.u32 %s40, 1
        %s196 = smul.addr %s195, 32
        %s197 = scalar_lea.vmem [#allocation4], %s196
        // Predicated region
        $region33: #{tpu_custom_call.1} parent=31 // pred_check
          %p198 = pneg %p53
        $region34: #{tpu_custom_call.1} parent=31 // pred_check_branch
          %200 = sbr.rel (%p198) target = $region36
        $region35: #{tpu_custom_call.1} parent=31 // pred_region
          %201 = dma.done %s194, 512
        $region36: #{tpu_custom_call.1} parent=31 // pred_fallthru
          _
        %s202 = sand.u32 %s40, 1
        %s203 = scalar_lea.sflag [#allocation5], %s202
        %s204 = sand.u32 %s40, 1
        %s205 = smul.addr %s204, 32
        %s206 = scalar_lea.vmem [#allocation4], %s205
        %p207 = pneg %p53
        %p208 = pneg %p50
        %s209 = smul.u32 4, %s22
        %p210 = scmp.lt.s32.totalorder %s209, 7
        %s211 = scalar_select %p210, %s209, 7
        %s212 = smul.addr %s211, 8
        %s213 = scalar_lea.vmem %s1, %s212
        %p214 = pneg %p79
        %p215 = pneg %p76
        %s216 = smul.u32 4, %s22
        %p217 = scmp.lt.s32.totalorder %s216, 7
        %s218 = scalar_select %p217, %s216, 7
        %s219 = smul.addr %s218, 8
        %s220 = scalar_lea.vmem %s2, %s219
        %p221 = pneg %p105
        %p222 = pneg %p102
        %p223 = pneg %p126
        %p224 = pneg %p123
        %s225 = smul.u32 4, %s22
        %s226 = smul.u32 4, %s22
        %p227 = scmp.lt.s32.totalorder %s226, 7
        %s228 = scalar_select %p227, %s226, 7
        %s229 = smul.addr %s228, 8
        %s230 = scalar_lea.vmem %s1, %s229
        %s231 = smul.u32 4, %s22
        %s232 = smul.u32 4, %s22
        %p233 = scmp.lt.s32.totalorder %s232, 7
        %s234 = scalar_select %p233, %s232, 7
        %s235 = smul.addr %s234, 8
        %s236 = scalar_lea.vmem %s2, %s235
        %s237 = smul.u32 4, %s22
        %p238 = scmp.eq.s32.totalorder %s22, 0
        %p239 = scmp.eq.s32.totalorder %s23, 0
        %p240 = pnand %p238, %p239
        %p241 = pneg %p240
        // Predicated region
        $region37: #{tpu_custom_call.1} parent=31 // pred_check
          _
        $region38: #{tpu_custom_call.1} parent=31 // pred_check_branch
          %243 = sbr.rel (%p240) target = $region40
        $region39: #{tpu_custom_call.1} parent=31 // pred_region
          %vm244 = vcmask 0
          %245 = vst.msk [vmem:[#allocation2] sm:$0x1] %vm244, 0.0
          %246 = vst.msk [vmem:[#allocation3] sm:$0x1] %vm244, 0.0
          %247 = vst.msk [vmem:[#allocation7] sm:$0x1] %vm244, 0.0
        $region40: #{tpu_custom_call.1} parent=31 // pred_fallthru
          _
        %v248 = vld [vmem:[%s197] sm:$0xff]
        %v249 = vld [vmem:[%s197 + $0x8] sm:$0xff]
        %v250 = vld [vmem:[%s197 + $0x10] sm:$0xff]
        %v251 = vld [vmem:[%s197 + $0x18] sm:$0xff]
        %v252 = vld [vmem:[%s230] sm:$0xff]
        %v253 = vld [vmem:[%s230 + $0x8] sm:$0xff]
        %v254 = vld [vmem:[%s230 + $0x10] sm:$0xff]
        %v255 = vld [vmem:[%s230 + $0x18] sm:$0xff]
        %v256 = vld [vmem:[%s236] sm:$0xff]
        %v257 = vld [vmem:[%s236 + $0x8] sm:$0xff]
        %v258 = vld [vmem:[%s236 + $0x10] sm:$0xff]
        %v259 = vld [vmem:[%s236 + $0x18] sm:$0xff]
        %v260 = vlaneseq
        %v261 = vand.u32 %v260, 127
        %s262 = smul.u32 %s23, 128
        %v263 = vstv %s262
        %v264 = vadd.s32 %v261, %v263
        %265 = vset.pattern.permute.xlu0 0
        %266 = vperm.xlu0 %265, %v252
        %v267 = vpop.permute.xlu0 %266
        %268 = vset.pattern.permute.xlu0 0
        %269 = vperm.xlu0 %268, %v253
        %v270 = vpop.permute.xlu0 %269
        %271 = vset.pattern.permute.xlu0 0
        %272 = vperm.xlu0 %271, %v254
        %v273 = vpop.permute.xlu0 %272
        %274 = vset.pattern.permute.xlu0 0
        %275 = vperm.xlu0 %274, %v255
        %v276 = vpop.permute.xlu0 %275
        %vm277 = vcmp.eq.s32.totalorder %v264, %v267
        %vm278 = vcmp.eq.s32.totalorder %v264, %v270
        %vm279 = vcmp.eq.s32.totalorder %v264, %v273
        %vm280 = vcmp.eq.s32.totalorder %v264, %v276
        %v281 = vsel %vm277, %v248, 0.0
        %v282 = vsel %vm278, %v249, 0.0
        %v283 = vsel %vm279, %v250, 0.0
        %v284 = vsel %vm280, %v251, 0.0
        %285 = vadd.xlane.f32.xlu0 %v281
        %v286 = vpop.xlane.xlu0 %285
        %287 = vadd.xlane.f32.xlu0 %v282
        %v288 = vpop.xlane.xlu0 %287
        %289 = vadd.xlane.f32.xlu0 %v283
        %v290 = vpop.xlane.xlu0 %289
        %291 = vadd.xlane.f32.xlu0 %v284
        %v292 = vpop.xlane.xlu0 %291
        %v293 = vld [vmem:[#allocation2] sm:$0x1]
        %v294 = vsub.f32 0.0, %v286
        %v295 = vsub.f32 0.0, %v288
        %v296 = vsub.f32 0.0, %v290
        %v297 = vsub.f32 0.0, %v292
        %v298 = vmul.f32 %v294, %v256
        %v299 = vmul.f32 %v295, %v257
        %v300 = vmul.f32 %v296, %v258
        %v301 = vmul.f32 %v297, %v259
        %vm302 = vcmask 7168
        %v303 = vsel %vm302, %v298, 0.0
        %v304 = vsel %vm302, %v299, 0.0
        %v305 = vadd.f32 %v303, %v304
        %v306 = vsel %vm302, %v300, 0.0
        %v307 = vadd.f32 %v305, %v306
        %v308 = vsel %vm302, %v301, 0.0
        %v309 = vadd.f32 %v307, %v308
        %v310 = vrot.slane %v309, 4
        %v311 = vadd.f32 %v309, %v310
        %v312 = vrot.slane %v311, 2
        %v313 = vadd.f32 %v311, %v312
        %v314 = vrot.slane %v313, 1
        %v315 = vadd.f32 %v313, %v314
        %v316 = vadd.f32 %v293, %v315
        %vm317 = vcmask 0
        %318 = vst.msk [vmem:[#allocation2] sm:$0x1] %vm317, %v316
        // Predicated region
        $region41: #{tpu_custom_call.1} parent=31 // pred_check
          %p319 = pneg %p239
        $region42: #{tpu_custom_call.1} parent=31 // pred_check_branch
          %321 = sbr.rel (%p319) target = $region44
        $region43: #{tpu_custom_call.1} parent=31 // pred_region
          %v322 = vld [vmem:[#allocation3] sm:$0x1]
          %v323 = vsel %vm302, %v256, 0.0
          %v324 = vsel %vm302, %v257, 0.0
          %v325 = vadd.f32 %v323, %v324
          %v326 = vsel %vm302, %v258, 0.0
          %v327 = vadd.f32 %v325, %v326
          %v328 = vsel %vm302, %v259, 0.0
          %v329 = vadd.f32 %v327, %v328
          %v330 = vrot.slane %v329, 4
          %v331 = vadd.f32 %v329, %v330
          %v332 = vrot.slane %v331, 2
          %v333 = vadd.f32 %v331, %v332
          %v334 = vrot.slane %v333, 1
          %v335 = vadd.f32 %v333, %v334
          %v336 = vadd.f32 %v322, %v335
          %337 = vst.msk [vmem:[#allocation3] sm:$0x1] %vm317, %v336
        $region44: #{tpu_custom_call.1} parent=31 // pred_fallthru
          _
        %p338 = scmp.eq.s32.totalorder %s22, 1
        %p339 = scmp.eq.s32.totalorder %s23, 2
        %p340 = pnand %p338, %p339
        %p341 = pneg %p340
        // Predicated region
        $region45: #{tpu_custom_call.1} parent=31 // pred_check
          _
        $region46: #{tpu_custom_call.1} parent=31 // pred_check_branch
          %343 = sbr.rel (%p340) target = $region48
        $region47: #{tpu_custom_call.1} parent=31 // pred_region
          %v344 = vld [vmem:[#allocation2] sm:$0x1]
          %v345 = vld [vmem:[#allocation3] sm:$0x1]
          %v346 = vrcp.pop %v345
          %v347 = vmul.f32 %v344, %v346
          %348 = vst.msk [vmem:[#allocation7] sm:$0x1] %vm317, %v347
        $region48: #{tpu_custom_call.1} parent=31 // pred_fallthru
          _
        // Predicated region
        $region49: #{tpu_custom_call.1} parent=31 // pred_check
          %p349 = pneg %p123
        $region50: #{tpu_custom_call.1} parent=31 // pred_check_branch
          %351 = sbr.rel (%p349) target = $region52
        $region51: #{tpu_custom_call.1} parent=31 // pred_region
          %s353 = ssub.s32 16, 16
          %354 = vsyncadd [#allocation6], %s353
          %s356 = sshll.u32 [#allocation7], 4
          %s357 = int_to_ptr.vmem [resolvable:$true] %s356
          %359 = dma.vmem_to_hbm [thread:$0]  %s357, 16, %s3, [#allocation6]
        $region52: #{tpu_custom_call.1} parent=31 // pred_fallthru
          _
        // Predicated region
        $region53: #{tpu_custom_call.1} parent=31 // pred_check
          %p360 = pneg %p123
        $region54: #{tpu_custom_call.1} parent=31 // pred_check_branch
          %362 = sbr.rel (%p360) target = $region56
        $region55: #{tpu_custom_call.1} parent=31 // pred_region
          %363 = dma.done [#allocation6], 16
        $region56: #{tpu_custom_call.1} parent=31 // pred_fallthru
          _
      $region32: #{tpu_custom_call.1} parent=5 // pred_fallthru
        _
      %p364 = scmp.le.s32.totalorder 2, %s13
      // Predicated region
      $region57: #{tpu_custom_call.1} parent=5 // pred_check
        %p365 = pneg %p364
      $region58: #{tpu_custom_call.1} parent=5 // pred_check_branch
        %367 = sbr.rel (%p365) target = $region60
      $region59: #{tpu_custom_call.1} parent=5 // pred_region
        %s368 = ssub.s32 %s13, 2
      $region60: #{tpu_custom_call.1} parent=5 // pred_fallthru
        _
    $region6: #{tpu_custom_call.1} parent=1 // loop_footer
      %s17 = sadd.s32 1, %s13
    $region7: #{tpu_custom_call.1} parent=1 // loop_footer_branch
      %12 = sbr.rel target = $region3
    $region8: #{tpu_custom_call.1} parent=1 // loop_exit
      _
    %369 = vsyncpa [#allocation5], 1
    %s370 = scalar_lea.sflag [#allocation5], 1
    %371 = vsyncpa %s370, 1
    %372 = vsyncpa [#allocation6], 1
    %s373 = scalar_lea.sflag [#allocation6], 1
    %374 = vsyncpa %s373, 1

</llo_original>
